<compile_context>
chip_gen: v6e
topology: v6e:2x2x1
jax: 0.10.0
libtpu: 0.0.40
codegen_flags: <defaults>
</compile_context>

<pallas_src>
import functools

import jax
import jax.numpy as jnp
from jax.experimental import pallas as pl
from jax.experimental.pallas import tpu as pltpu

ALPHA = 0.3
BETA = 0.7
SMOOTH = 1e-6


def _tversky_partials_kernel(logits_ref, targets_ref, out_ref, *,
                             n_total, block_n, tiles_per_split):
    # logits_ref : (C, TN) native dtype (class-major tile)
    # targets_ref: (1, TN) int32
    # out_ref    : (C, 3) float32 partials for this split: [TP, sum(probs), count]
    split = pl.program_id(0)
    step = pl.program_id(1)

    @pl.when(step == 0)
    def _():
        out_ref[...] = jnp.zeros_like(out_ref)

    # Cast per-tile; all softmax math in f32 (v5e has no bf16 VPU/EUP anyway).
    x = logits_ref[...].astype(jnp.float32)                     # (C, TN)

    # Softmax over the class (sublane) axis.
    m = jnp.max(x, axis=0, keepdims=True)                       # (1, TN)
    e = jnp.exp(x - m)                                          # (C, TN)
    denom = jnp.sum(e, axis=0, keepdims=True)                   # (1, TN)
    probs = e * pl.reciprocal(denom, approx=False)              # (C, TN)

    # Validity mask: global batch index of each lane must be < N.  This covers
    # the tail tile and any fully out-of-range tile of an over-allocated split.
    tile_idx = split * tiles_per_split + step                   # unclamped
    col = tile_idx * block_n + jax.lax.broadcasted_iota(jnp.int32, x.shape, 1)
    valid = col < n_total                                       # (C, TN)

    # One-hot(targets) built in-registers: class iota (sublanes) == targets row.
    cls = jax.lax.broadcasted_iota(jnp.int32, x.shape, 0)       # (C, TN)
    onehot = jnp.where(valid & (cls == targets_ref[...]), 1.0, 0.0)
    probs = jnp.where(valid, probs, 0.0)

    # Per-class partial sums over the batch (lane) axis; accumulate into the
    # resident output block.  FP/FN are recovered algebraically in the wrapper.
    out_ref[:, 0:1] += jnp.sum(probs * onehot, axis=1, keepdims=True)  # TP
    out_ref[:, 1:2] += jnp.sum(probs, axis=1, keepdims=True)           # S
    out_ref[:, 2:3] += jnp.sum(onehot, axis=1, keepdims=True)          # count


def tversky_loss(logits, targets, alpha=ALPHA, beta=BETA, smooth=SMOOTH,
                 *, block_n=8192, num_splits=2):
    """1 - mean_c Tversky_c, identical semantics to the PyTorch module."""
    N, C = logits.shape

    # Lane-dense, class-major presentation (native dtype; cast stays in-kernel).
    logits_cm = jnp.transpose(logits)                    # (C, N)
    targets_row = targets.reshape(1, N).astype(jnp.int32)

    # Tile size: multiple of 128 lanes, no larger than N padded to 128.
    n_pad = ((N + 127) // 128) * 128
    block_n = max(128, min((block_n // 128) * 128, n_pad))
    n_tiles = int(pl.cdiv(N, block_n))
    num_splits = max(1, min(num_splits, n_tiles))
    tiles_per_split = int(pl.cdiv(n_tiles, num_splits))

    def col_index_map(s, i):
        # Clamp so over-allocated trailing tiles of a split stay in-bounds;
        # their contribution is masked to zero inside the kernel.
        t = jnp.minimum(s * tiles_per_split + i, n_tiles - 1)
        return (0, t)

    kernel = functools.partial(
        _tversky_partials_kernel,
        n_total=N, block_n=block_n, tiles_per_split=tiles_per_split)

    partials = pl.pallas_call(
        kernel,
        out_shape=jax.ShapeDtypeStruct((num_splits, C, 3), jnp.float32),
        grid=(num_splits, tiles_per_split),
        in_specs=[
            pl.BlockSpec((C, block_n), col_index_map),
            pl.BlockSpec((1, block_n), col_index_map),
        ],
        out_specs=pl.BlockSpec((None, C, 3), lambda s, i: (s, 0, 0)),
        compiler_params=pltpu.CompilerParams(
            dimension_semantics=("parallel", "arbitrary")),
    )(logits_cm, targets_row)

    # Tiny epilogue on (num_splits, C, 3): combine splits, form the loss.
    sums = jnp.sum(partials, axis=0)                     # (C, 3)
    tp = sums[:, 0]
    fp = sums[:, 1] - tp                                 # sum(probs) - TP
    fn = sums[:, 2] - tp                                 # count      - TP
    tversky = (tp + smooth) / (tp + alpha * fp + beta * fn + smooth)
    return 1.0 - jnp.mean(tversky)


def _reference_tversky(logits, targets, alpha=ALPHA, beta=BETA, smooth=SMOOTH):
    # Pure-JAX reference mirroring the PyTorch forward exactly.
    probs = jax.nn.softmax(logits.astype(jnp.float32), axis=1)
    onehot = jax.nn.one_hot(targets, logits.shape[1], dtype=jnp.float32)
    tp = jnp.sum(probs * onehot, axis=0)
    fp = jnp.sum(probs * (1.0 - onehot), axis=0)
    fn = jnp.sum((1.0 - probs) * onehot, axis=0)
    tversky = (tp + smooth) / (tp + alpha * fp + beta * fn + smooth)
    return 1.0 - jnp.mean(tversky)


if __name__ == "__main__":
    # TverskyLoss has no learned parameters (only scalar hyperparameters).
    key = jax.random.PRNGKey(0)
    k1, k2, k3, k4 = jax.random.split(key, 4)

    # Case 1: N=300, C=8 with block_n=128 exercises the full kernel: multi-tile
    # grid, 2-way split, tail masking (300 % 128 != 0) and an over-allocated
    # (fully masked) trailing tile on the second split.
    N, C = 300, 8
    logits = jax.random.normal(k1, (N, C), dtype=jnp.float32)
    targets = jax.random.randint(k2, (N,), 0, C, dtype=jnp.int32)
    loss = jax.block_until_ready(tversky_loss(logits, targets, block_n=128))
    ref = jax.block_until_ready(_reference_tversky(logits, targets))
    assert jnp.isfinite(loss), "kernel produced non-finite loss"
    assert abs(float(loss) - float(ref)) < 1e-5, (float(loss), float(ref))

    # Case 2: bf16 logits, default tiling (block_n clamps to padded N, single
    # split) exercises the in-kernel dtype cast and the single-tile path.
    N2, C2 = 1000, 8
    logits2 = jax.random.normal(k3, (N2, C2), dtype=jnp.float32).astype(jnp.bfloat16)
    targets2 = jax.random.randint(k4, (N2,), 0, C2, dtype=jnp.int32)
    loss2 = jax.block_until_ready(tversky_loss(logits2, targets2))
    ref2 = jax.block_until_ready(_reference_tversky(logits2, targets2))
    assert jnp.isfinite(loss2), "kernel produced non-finite loss (bf16 case)"
    assert abs(float(loss2) - float(ref2)) < 1e-5, (float(loss2), float(ref2))

    print("KERNEL_OK")
</pallas_src>

<mosaic_0001>
module attributes {stable_mosaic.version = 11 : i64} {
  func.func @_tversky_partials_kernel(%arg0: i32, %arg1: i32, %arg2: memref<8x128xf32, #tpu.memory_space<vmem>>, %arg3: memref<1x128xi32, #tpu.memory_space<vmem>>, %arg4: memref<1x8x3xf32, #tpu.memory_space<vmem>>) attributes {dimension_semantics = [#tpu.dimension_semantics<parallel>, #tpu.dimension_semantics<arbitrary>], iteration_bounds = array<i64: 2, 2>, scalar_prefetch = 0 : i64, scratch_operands = 0 : i64, tpu.core_type = #tpu.core_type<tc>, window_params = [{transform_indices = @transform_0, window_bounds = array<i64: 8, 128>}, {transform_indices = @transform_1, window_bounds = array<i64: 1, 128>}, {transform_indices = @transform_2, window_bounds = array<i64: 1, 8, 3>}]} {
    %c0_i32 = arith.constant 0 : i32
    %0 = arith.cmpi eq, %arg1, %c0_i32 : i32
    %1 = arith.extui %0 : i1 to i32
    %c0_i32_0 = arith.constant 0 : i32
    %2 = arith.cmpi ne, %1, %c0_i32_0 : i32
    scf.if %2 {
      %cst_27 = arith.constant 0.000000e+00 : f32
      %57 = vector.broadcast %cst_27 : f32 to vector<8x3xf32>
      %c0_28 = arith.constant 0 : index
      %c0_29 = arith.constant 0 : index
      %c0_30 = arith.constant 0 : index
      %58 = vector.load %arg4[%c0_28, %c0_29, %c0_30] : memref<1x8x3xf32, #tpu.memory_space<vmem>>, vector<1x8x3xf32>
      %59 = vector.shape_cast %58 : vector<1x8x3xf32> to vector<8x3xf32>
      %60 = vector.shape_cast %57 : vector<8x3xf32> to vector<1x8x3xf32>
      tpu.vector_store %arg4[%c0_28, %c0_29, %c0_30], %60 {strides = array<i32>} : memref<1x8x3xf32, #tpu.memory_space<vmem>>, vector<1x8x3xf32>,
    } else {
    }
    %c0 = arith.constant 0 : index
    %c0_1 = arith.constant 0 : index
    %3 = vector.load %arg2[%c0, %c0_1] : memref<8x128xf32, #tpu.memory_space<vmem>>, vector<8x128xf32>
    %cst = arith.constant dense<0xFF800000> : vector<128xf32>
    %4 = vector.multi_reduction <maximumf>, %3, %cst [0] : vector<8x128xf32> to vector<128xf32>
    %5 = vector.shape_cast %4 : vector<128xf32> to vector<1x128xf32>
    %6 = vector.broadcast %5 : vector<1x128xf32> to vector<8x128xf32>
    %7 = arith.subf %3, %6 : vector<8x128xf32>
    %8 = math.exp %7 : vector<8x128xf32>
    %cst_2 = arith.constant dense<0.000000e+00> : vector<128xf32>
    %9 = vector.multi_reduction <add>, %8, %cst_2 [0] : vector<8x128xf32> to vector<128xf32>
    %10 = vector.shape_cast %9 : vector<128xf32> to vector<1x128xf32>
    %11 = tpu.reciprocal %10 : vector<1x128xf32> -> vector<1x128xf32>
    %12 = vector.broadcast %11 : vector<1x128xf32> to vector<8x128xf32>
    %13 = arith.mulf %8, %12 : vector<8x128xf32>
    %c2_i32 = arith.constant 2 : i32
    %14 = arith.muli %arg0, %c2_i32 : i32
    %15 = arith.addi %14, %arg1 : i32
    %c128_i32 = arith.constant 128 : i32
    %16 = arith.muli %15, %c128_i32 : i32
    %17 = tpu.iota {dimensions = array<i32: 1>} : vector<8x128xi32>
    %18 = vector.broadcast %16 : i32 to vector<8x128xi32>
    %19 = arith.addi %18, %17 : vector<8x128xi32>
    %c300_i32 = arith.constant 300 : i32
    %20 = vector.broadcast %c300_i32 : i32 to vector<8x128xi32>
    %21 = arith.cmpi slt, %19, %20 : vector<8x128xi32>
    %22 = tpu.iota {dimensions = array<i32: 0>} : vector<8x128xi32>
    %c0_3 = arith.constant 0 : index
    %c0_4 = arith.constant 0 : index
    %23 = vector.load %arg3[%c0_3, %c0_4] : memref<1x128xi32, #tpu.memory_space<vmem>>, vector<1x128xi32>
    %24 = vector.broadcast %23 : vector<1x128xi32> to vector<8x128xi32>
    %25 = arith.cmpi eq, %22, %24 : vector<8x128xi32>
    %26 = arith.andi %21, %25 : vector<8x128xi1>
    %cst_5 = arith.constant 1.000000e+00 : f32
    %cst_6 = arith.constant 0.000000e+00 : f32
    %27 = vector.broadcast %cst_5 : f32 to vector<8x128xf32>
    %28 = vector.broadcast %cst_6 : f32 to vector<8x128xf32>
    %29 = arith.select %26, %27, %28 : vector<8x128xi1>, vector<8x128xf32>
    %cst_7 = arith.constant 0.000000e+00 : f32
    %30 = vector.broadcast %cst_7 : f32 to vector<8x128xf32>
    %31 = arith.select %21, %13, %30 : vector<8x128xi1>, vector<8x128xf32>
    %c0_8 = arith.constant 0 : index
    %c0_9 = arith.constant 0 : index
    %c0_10 = arith.constant 0 : index
    %32 = vector.load %arg4[%c0_8, %c0_9, %c0_10] : memref<1x8x3xf32, #tpu.memory_space<vmem>>, vector<1x8x1xf32>
    %33 = vector.shape_cast %32 : vector<1x8x1xf32> to vector<8x1xf32>
    %34 = arith.mulf %31, %29 : vector<8x128xf32>
    %cst_11 = arith.constant dense<0.000000e+00> : vector<8xf32>
    %35 = vector.multi_reduction <add>, %34, %cst_11 [1] : vector<8x128xf32> to vector<8xf32>
    %36 = vector.shape_cast %35 : vector<8xf32> to vector<8x1xf32>
    %37 = arith.addf %33, %36 : vector<8x1xf32>
    %c0_12 = arith.constant 0 : index
    %c0_13 = arith.constant 0 : index
    %c0_14 = arith.constant 0 : index
    %38 = vector.load %arg4[%c0_12, %c0_13, %c0_14] : memref<1x8x3xf32, #tpu.memory_space<vmem>>, vector<1x8x1xf32>
    %39 = vector.shape_cast %38 : vector<1x8x1xf32> to vector<8x1xf32>
    %40 = vector.shape_cast %37 : vector<8x1xf32> to vector<1x8x1xf32>
    tpu.vector_store %arg4[%c0_12, %c0_13, %c0_14], %40 {strides = array<i32>} : memref<1x8x3xf32, #tpu.memory_space<vmem>>, vector<1x8x1xf32>,
    %c0_15 = arith.constant 0 : index
    %c0_16 = arith.constant 0 : index
    %c1 = arith.constant 1 : index
    %41 = vector.load %arg4[%c0_15, %c0_16, %c1] : memref<1x8x3xf32, #tpu.memory_space<vmem>>, vector<1x8x1xf32>
    %42 = vector.shape_cast %41 : vector<1x8x1xf32> to vector<8x1xf32>
    %cst_17 = arith.constant dense<0.000000e+00> : vector<8xf32>
    %43 = vector.multi_reduction <add>, %31, %cst_17 [1] : vector<8x128xf32> to vector<8xf32>
    %44 = vector.shape_cast %43 : vector<8xf32> to vector<8x1xf32>
    %45 = arith.addf %42, %44 : vector<8x1xf32>
    %c0_18 = arith.constant 0 : index
    %c0_19 = arith.constant 0 : index
    %c1_20 = arith.constant 1 : index
    %46 = vector.load %arg4[%c0_18, %c0_19, %c1_20] : memref<1x8x3xf32, #tpu.memory_space<vmem>>, vector<1x8x1xf32>
    %47 = vector.shape_cast %46 : vector<1x8x1xf32> to vector<8x1xf32>
    %48 = vector.shape_cast %45 : vector<8x1xf32> to vector<1x8x1xf32>
    tpu.vector_store %arg4[%c0_18, %c0_19, %c1_20], %48 {strides = array<i32>} : memref<1x8x3xf32, #tpu.memory_space<vmem>>, vector<1x8x1xf32>,
    %c0_21 = arith.constant 0 : index
    %c0_22 = arith.constant 0 : index
    %c2 = arith.constant 2 : index
    %49 = vector.load %arg4[%c0_21, %c0_22, %c2] : memref<1x8x3xf32, #tpu.memory_space<vmem>>, vector<1x8x1xf32>
    %50 = vector.shape_cast %49 : vector<1x8x1xf32> to vector<8x1xf32>
    %cst_23 = arith.constant dense<0.000000e+00> : vector<8xf32>
    %51 = vector.multi_reduction <add>, %29, %cst_23 [1] : vector<8x128xf32> to vector<8xf32>
    %52 = vector.shape_cast %51 : vector<8xf32> to vector<8x1xf32>
    %53 = arith.addf %50, %52 : vector<8x1xf32>
    %c0_24 = arith.constant 0 : index
    %c0_25 = arith.constant 0 : index
    %c2_26 = arith.constant 2 : index
    %54 = vector.load %arg4[%c0_24, %c0_25, %c2_26] : memref<1x8x3xf32, #tpu.memory_space<vmem>>, vector<1x8x1xf32>
    %55 = vector.shape_cast %54 : vector<1x8x1xf32> to vector<8x1xf32>
    %56 = vector.shape_cast %53 : vector<8x1xf32> to vector<1x8x1xf32>
    tpu.vector_store %arg4[%c0_24, %c0_25, %c2_26], %56 {strides = array<i32>} : memref<1x8x3xf32, #tpu.memory_space<vmem>>, vector<1x8x1xf32>,
    return
  }
  func.func @transform_0(%arg0: i32, %arg1: i32) -> (i32, i32) {
    %c2_i32 = arith.constant 2 : i32
    %0 = arith.muli %arg0, %c2_i32 : i32
    %1 = arith.addi %0, %arg1 : i32
    %c2_i32_0 = arith.constant 2 : i32
    %2 = arith.minsi %1, %c2_i32_0 : i32
    %c0_i32 = arith.constant 0 : i32
    %c0_i32_1 = arith.constant 0 : i32
    return %c0_i32, %2 : i32, i32
  }
  func.func @transform_1(%arg0: i32, %arg1: i32) -> (i32, i32) {
    %c2_i32 = arith.constant 2 : i32
    %0 = arith.muli %arg0, %c2_i32 : i32
    %1 = arith.addi %0, %arg1 : i32
    %c2_i32_0 = arith.constant 2 : i32
    %2 = arith.minsi %1, %c2_i32_0 : i32
    %c0_i32 = arith.constant 0 : i32
    %c0_i32_1 = arith.constant 0 : i32
    return %c0_i32, %2 : i32, i32
  }
  func.func @transform_2(%arg0: i32, %arg1: i32) -> (i32, i32, i32) {
    %c0_i32 = arith.constant 0 : i32
    %c0_i32_0 = arith.constant 0 : i32
    %c0_i32_1 = arith.constant 0 : i32
    return %arg0, %c0_i32, %c0_i32_0 : i32, i32, i32
  }
}

</mosaic_0001>

<llo_original>
// kernel: tpu_custom_call.1
$region0: #{tpu_custom_call.1}
  #allocation0 [shape = 'u32[]', space=smem, size = 0x4, offset = 0x4, fixed_abs, tag = 'smem constant byte address 0x4 - core index']
  #allocation1 [shape = 'u32[144,128]{1,0:T(1,128)}', space=vmem, size = 0x12000, scoped, tag = 'internal scratch']
  %s0 = inlined_call_operand.hbm [shape: f32[8,300], index: 0, kind: input, shape index: {}]
  %s1 = inlined_call_operand.hbm [shape: s32[1,300], index: 1, kind: input, shape index: {}]
  %s2 = inlined_call_operand.vmem [shape: f32[2,8,3], index: 2, kind: output, shape index: {}]
  %s3 = sld [smem:[#allocation0]]
  $region53: #{tpu_custom_call.1} parent=0
    _
  %s5 = ssub.s32 1, %s3
  %s6 = scalar_select 0, %s5, %s3
  $region1: #{tpu_custom_call.1} parent=0
    #allocation2 [shape = 'u8[8192]{0}', space=vmem, size = 0x2000, scoped, tag = 'input window, operand 0']
    #allocation3 [shape = 's32[2]{0}', space=sflag, size = 0x8, scoped, tag = 'scoped memory for tpu_custom_call.1']
    #allocation4 [shape = 'u8[1024]{0}', space=vmem, size = 0x400, scoped, tag = 'input window, operand 1']
    #allocation5 [shape = 's32[2]{0}', space=sflag, size = 0x8, scoped, tag = 'scoped memory for tpu_custom_call.1']
    %7 = vsyncpa [#allocation3], 0
    %s8 = scalar_lea.sflag [#allocation3], 1
    %9 = vsyncpa %s8, 0
    %10 = vsyncpa [#allocation5], 0
    %s11 = scalar_lea.sflag [#allocation5], 1
    %12 = vsyncpa %s11, 0
    loop: start=0, step=1, limit=6
    $region2: #{tpu_custom_call.1} parent=1 // loop_pre_header
      _
    $region3: #{tpu_custom_call.1} parent=1 // loop_header
      %s14 = sphi 0, %s18
      %p15 = scmp.ge.s32.totalorder %s14, 6
      %s21 = sphi 0, %s33
      %s22 = sphi 0, %s29
      %s23 = sphi 0, %s21
      %s24 = sphi 0, %s22
      %s25 = sphi 0, %s23
      %s26 = sphi 0, %s24
      %s44 = sphi 0, %s46
      %s47 = sphi 0, %s44
      %s48 = sphi 0, %s47
      %s64 = sphi 0, %s48
      %s78 = sphi 0, %s80
      %s81 = sphi 0, %s78
      %s82 = sphi 0, %s81
      %s98 = sphi 0, %s82
      %s104 = sphi 0, %s106
      %s107 = sphi 0, %s104
      %s108 = sphi 0, %s107
      %s124 = sphi 0, %s108
    $region4: #{tpu_custom_call.1} parent=1 // loop_header_branch
      %17 = sbr.rel (%p15) target = $region8
    $region5: #{tpu_custom_call.1} parent=1 // loop_body
      %s19 = ssub.s32 %s14, 1
      %s20 = ssub.s32 %s14, 2
      %s27 = sadd.s32 1, %s22
      %p28 = scmp.ge.s32.totalorder %s27, 2
      %s29 = scalar_select %p28, 0, %s27
      %s30 = sadd.s32 1, %s21
      %s31 = scalar_select %p28, %s30, %s21
      %p32 = scmp.ge.s32.totalorder %s31, 2
      %s33 = scalar_select %p32, 0, %s31
      %s34 = smul.u32 %s21, 2
      %s35 = sadd.s32 %s34, %s22
      %p36 = scmp.lt.s32.totalorder %s35, 2
      %s37 = scalar_select %p36, %s35, 2
      %s38 = smul.u32 %s33, 2
      %s39 = sadd.s32 %s38, %s29
      %p40 = scmp.lt.s32.totalorder %s39, 2
      %s41 = scalar_select %p40, %s39, 2
      %s42 = ssub.s32 %s37, %s41
      %p43 = scmp.eq.s32.totalorder %s42, 0
      %s45 = sadd.s32 %s44, 1
      %s46 = scalar_select %p43, %s44, %s45
      %p49 = pneg %p43
      %p50 = scmp.eq.s32.totalorder %s14, 3
      %p51 = por %p49, %p50
      %p52 = scmp.ne.s32.totalorder %s44, %s47
      %p53 = scmp.eq.s32.totalorder %s14, 0
      %p54 = por %p52, %p53
      %p55 = scmp.ne.s32.totalorder %s44, %s47
      %p56 = scmp.eq.s32.totalorder %s19, 3
      %p57 = por %p55, %p56
      %p58 = scmp.ne.s32.totalorder %s47, %s48
      %p59 = scmp.eq.s32.totalorder %s19, 0
      %p60 = por %p58, %p59
      %p61 = scmp.ne.s32.totalorder %s47, %s48
      %p62 = scmp.eq.s32.totalorder %s20, 3
      %p63 = por %p61, %p62
      %p65 = scmp.ne.s32.totalorder %s48, %s64
      %p66 = scmp.eq.s32.totalorder %s20, 0
      %p67 = por %p65, %p66
      %s68 = smul.u32 %s21, 2
      %s69 = sadd.s32 %s68, %s22
      %p70 = scmp.lt.s32.totalorder %s69, 2
      %s71 = scalar_select %p70, %s69, 2
      %s72 = smul.u32 %s33, 2
      %s73 = sadd.s32 %s72, %s29
      %p74 = scmp.lt.s32.totalorder %s73, 2
      %s75 = scalar_select %p74, %s73, 2
      %s76 = ssub.s32 %s71, %s75
      %p77 = scmp.eq.s32.totalorder %s76, 0
      %s79 = sadd.s32 %s78, 1
      %s80 = scalar_select %p77, %s78, %s79
      %p83 = pneg %p77
      %p84 = scmp.eq.s32.totalorder %s14, 3
      %p85 = por %p83, %p84
      %p86 = scmp.ne.s32.totalorder %s78, %s81
      %p87 = scmp.eq.s32.totalorder %s14, 0
      %p88 = por %p86, %p87
      %p89 = scmp.ne.s32.totalorder %s78, %s81
      %p90 = scmp.eq.s32.totalorder %s19, 3
      %p91 = por %p89, %p90
      %p92 = scmp.ne.s32.totalorder %s81, %s82
      %p93 = scmp.eq.s32.totalorder %s19, 0
      %p94 = por %p92, %p93
      %p95 = scmp.ne.s32.totalorder %s81, %s82
      %p96 = scmp.eq.s32.totalorder %s20, 3
      %p97 = por %p95, %p96
      %p99 = scmp.ne.s32.totalorder %s82, %s98
      %p100 = scmp.eq.s32.totalorder %s20, 0
      %p101 = por %p99, %p100
      %s102 = ssub.s32 %s21, %s33
      %p103 = scmp.eq.s32.totalorder %s102, 0
      %s105 = sadd.s32 %s104, 1
      %s106 = scalar_select %p103, %s104, %s105
      %p109 = pneg %p103
      %p110 = scmp.eq.s32.totalorder %s14, 3
      %p111 = por %p109, %p110
      %p112 = scmp.ne.s32.totalorder %s104, %s107
      %p113 = scmp.eq.s32.totalorder %s14, 0
      %p114 = por %p112, %p113
      %p115 = scmp.ne.s32.totalorder %s104, %s107
      %p116 = scmp.eq.s32.totalorder %s19, 3
      %p117 = por %p115, %p116
      %p118 = scmp.ne.s32.totalorder %s107, %s108
      %p119 = scmp.eq.s32.totalorder %s19, 0
      %p120 = por %p118, %p119
      %p121 = scmp.ne.s32.totalorder %s107, %s108
      %p122 = scmp.eq.s32.totalorder %s20, 3
      %p123 = por %p121, %p122
      %p125 = scmp.ne.s32.totalorder %s108, %s124
      %p126 = scmp.eq.s32.totalorder %s20, 0
      %p127 = por %p125, %p126
      %p128 = scmp.le.s32.totalorder 1, %s14
      %p129 = scmp.lt.s32.totalorder %s14, 5
      %p130 = pnand %p128, %p129
      %p131 = pneg %p130
      // Predicated region
      $region9: #{tpu_custom_call.1} parent=5 // pred_check
        _
      $region10: #{tpu_custom_call.1} parent=5 // pred_check_branch
        %133 = sbr.rel (%p130) target = $region12
      $region11: #{tpu_custom_call.1} parent=5 // pred_region
        %s134 = ssub.s32 %s14, 1
      $region12: #{tpu_custom_call.1} parent=5 // pred_fallthru
        _
      %p135 = scmp.lt.s32.totalorder %s14, 4
      // Predicated region
      $region13: #{tpu_custom_call.1} parent=5 // pred_check
        %p136 = pneg %p135
      $region14: #{tpu_custom_call.1} parent=5 // pred_check_branch
        %138 = sbr.rel (%p136) target = $region16
      $region15: #{tpu_custom_call.1} parent=5 // pred_region
        // Predicated region
        $region17: #{tpu_custom_call.1} parent=15 // pred_check
          %p139 = pneg %p54
        $region18: #{tpu_custom_call.1} parent=15 // pred_check_branch
          %141 = sbr.rel (%p139) target = $region20
        $region19: #{tpu_custom_call.1} parent=15 // pred_region
          %s142 = sand.u32 %s44, 1
          %s143 = scalar_lea.sflag [#allocation3], %s142
          %s144 = sand.u32 %s44, 1
          %s145 = smul.addr %s144, 8
          %s146 = scalar_lea.vmem [#allocation2], %s145
          %s147 = smul.u32 %s21, 2
          %s148 = sadd.s32 %s147, %s22
          %p149 = scmp.lt.s32.totalorder %s148, 2
          %s150 = scalar_select %p149, %s148, 2
          %s152 = ssub.s32 128, 128
          %153 = vsyncadd %s143, %s152
          %s154 = smul.addr %s150, 128
          %s155 = scalar_lea.hbm %s0, %s154
          %s157 = sshll.u32 %s146, 4
          %s158 = int_to_ptr.vmem [resolvable:$true] %s157
          %160 = dma.hbm_to_vmem [thread:$0]  %s155, 128, %s158, %s143
        $region20: #{tpu_custom_call.1} parent=15 // pred_fallthru
          _
        // Predicated region
        $region21: #{tpu_custom_call.1} parent=15 // pred_check
          %p161 = pneg %p88
        $region22: #{tpu_custom_call.1} parent=15 // pred_check_branch
          %163 = sbr.rel (%p161) target = $region24
        $region23: #{tpu_custom_call.1} parent=15 // pred_region
          %s164 = sand.u32 %s78, 1
          %s165 = scalar_lea.sflag [#allocation5], %s164
          %s166 = sand.u32 %s78, 1
          %s167 = scalar_lea.vmem [#allocation4], %s166
          %s168 = smul.u32 %s21, 2
          %s169 = sadd.s32 %s168, %s22
          %p170 = scmp.lt.s32.totalorder %s169, 2
          %s171 = scalar_select %p170, %s169, 2
          %s173 = ssub.s32 16, 16
          %174 = vsyncadd %s165, %s173
          %s175 = smul.addr %s171, 16
          %s176 = scalar_lea.hbm %s1, %s175
          %s178 = sshll.u32 %s167, 4
          %s179 = int_to_ptr.vmem [resolvable:$true] %s178
          %181 = dma.hbm_to_vmem [thread:$0]  %s176, 16, %s179, %s165
        $region24: #{tpu_custom_call.1} parent=15 // pred_fallthru
          _
      $region16: #{tpu_custom_call.1} parent=5 // pred_fallthru
        _
      %p182 = scmp.le.s32.totalorder 1, %s14
      %p183 = scmp.lt.s32.totalorder %s14, 5
      %p184 = pnand %p182, %p183
      %p185 = pneg %p184
      // Predicated region
      $region25: #{tpu_custom_call.1} parent=5 // pred_check
        _
      $region26: #{tpu_custom_call.1} parent=5 // pred_check_branch
        %187 = sbr.rel (%p184) target = $region28
      $region27: #{tpu_custom_call.1} parent=5 // pred_region
        %s188 = ssub.s32 %s14, 1
        %s189 = sand.u32 %s47, 1
        %s190 = scalar_lea.sflag [#allocation3], %s189
        %s191 = sand.u32 %s47, 1
        %s192 = smul.addr %s191, 8
        %s193 = scalar_lea.vmem [#allocation2], %s192
        // Predicated region
        $region29: #{tpu_custom_call.1} parent=27 // pred_check
          %p194 = pneg %p60
        $region30: #{tpu_custom_call.1} parent=27 // pred_check_branch
          %196 = sbr.rel (%p194) target = $region32
        $region31: #{tpu_custom_call.1} parent=27 // pred_region
          %197 = dma.done %s190, 128
        $region32: #{tpu_custom_call.1} parent=27 // pred_fallthru
          _
        %s198 = sand.u32 %s81, 1
        %s199 = scalar_lea.sflag [#allocation5], %s198
        %s200 = sand.u32 %s81, 1
        %s201 = scalar_lea.vmem [#allocation4], %s200
        // Predicated region
        $region33: #{tpu_custom_call.1} parent=27 // pred_check
          %p202 = pneg %p94
        $region34: #{tpu_custom_call.1} parent=27 // pred_check_branch
          %204 = sbr.rel (%p202) target = $region36
        $region35: #{tpu_custom_call.1} parent=27 // pred_region
          %205 = dma.done %s199, 16
        $region36: #{tpu_custom_call.1} parent=27 // pred_fallthru
          _
        %s206 = sand.u32 %s47, 1
        %s207 = scalar_lea.sflag [#allocation3], %s206
        %s208 = sand.u32 %s47, 1
        %s209 = smul.addr %s208, 8
        %s210 = scalar_lea.vmem [#allocation2], %s209
        %p211 = pneg %p60
        %p212 = pneg %p57
        %s213 = sand.u32 %s81, 1
        %s214 = scalar_lea.sflag [#allocation5], %s213
        %s215 = sand.u32 %s81, 1
        %s216 = scalar_lea.vmem [#allocation4], %s215
        %p217 = pneg %p94
        %p218 = pneg %p91
        %p219 = pneg %p120
        %p220 = pneg %p117
        %p221 = scmp.lt.s32.totalorder %s23, 1
        %s222 = scalar_select %p221, %s23, 1
        %s223 = smul.addr %s222, 8
        %s224 = scalar_lea.vmem %s2, %s223
        %s225 = smul.u32 %s23, 2
        %s226 = sadd.s32 %s225, %s24
        %p227 = scmp.lt.s32.totalorder %s226, 2
        %s228 = scalar_select %p227, %s226, 2
        %s229 = smul.u32 %s23, 2
        %s230 = sadd.s32 %s229, %s24
        %p231 = scmp.lt.s32.totalorder %s230, 2
        %s232 = scalar_select %p231, %s230, 2
        %p233 = scmp.lt.s32.totalorder %s23, 1
        %s234 = scalar_select %p233, %s23, 1
        %s235 = smul.addr %s234, 8
        %s236 = scalar_lea.vmem %s2, %s235
        %p237 = scmp.eq.s32.totalorder %s24, 0
        // Predicated region
        $region37: #{tpu_custom_call.1} parent=27 // pred_check
          %p238 = pneg %p237
        $region38: #{tpu_custom_call.1} parent=27 // pred_check_branch
          %240 = sbr.rel (%p238) target = $region40
        $region39: #{tpu_custom_call.1} parent=27 // pred_region
          %vm241 = vcmask 23552
          %242 = vst.msk [vmem:[%s236] sm:$0xff] %vm241, 0.0
        $region40: #{tpu_custom_call.1} parent=27 // pred_fallthru
          _
        %v243 = vld [vmem:[%s193] sm:$0xff]
        %v244 = vrot.slane %v243, 4
        %v245 = vmax.f32 %v243, %v244
        %v246 = vrot.slane %v245, 2
        %v247 = vmax.f32 %v245, %v246
        %v248 = vrot.slane %v247, 1
        %v249 = vmax.f32 %v247, %v248
        %v250 = vsub.f32 %v243, %v249
        %v251 = vmul.f32 %v250, 1.442695
        %v252 = vpow.pop %v251
        %v253 = vrot.slane %v252, 4
        %v254 = vadd.f32 %v252, %v253
        %v255 = vrot.slane %v254, 2
        %v256 = vadd.f32 %v254, %v255
        %v257 = vrot.slane %v256, 1
        %v258 = vadd.f32 %v256, %v257
        %v259 = vrcp.pop %v258
        %v260 = vmul.f32 %v252, %v259
        %s261 = smul.u32 %s23, 2
        %s262 = sadd.s32 %s261, %s24
        %s263 = smul.u32 %s262, 128
        %v264 = vlaneseq
        %v265 = vand.u32 %v264, 127
        %v266 = vstv %s263
        %v267 = vadd.s32 %v266, %v265
        %vm268 = vcmp.lt.s32.totalorder %v267, 300
        %v269 = vlaneseq
        %v270 = vshrl.u32 %v269, 7
        %v271 = vld [vmem:[%s201] sm:$0x1]
        %v272 = vlaneseq
        %v273 = vshrl.u32 %v272, 7
        %v274 = vsub.s32 0, %v273
        %v275 = vrot.slane %v271, %v274
        %vm276 = vcmp.eq.s32.totalorder %v270, %v275
        %vm277 = vmand %vm268, %vm276
        %v278 = vsel %vm277, 1.0, 0.0
        %v279 = vsel %vm268, %v260, 0.0
        %v280 = vld [vmem:[%s236] sm:$0xff]
        %v281 = vmul.f32 %v279, %v278
        %282 = vadd.xlane.f32.xlu0 %v281
        %v283 = vpop.xlane.xlu0 %282
        %v284 = vadd.f32 %v280, %v283
        %vm285 = vcmask 7168
        %286 = vst.msk [vmem:[%s236] sm:$0xff] %vm285, %v284
        %v287 = vld [vmem:[%s236] sm:$0xff]
        %288 = vadd.xlane.f32.xlu0 %v279
        %v289 = vpop.xlane.xlu0 %288
        %v290 = vadd.f32 %v287, %v289
        %vm291 = vcmask 15368
        %292 = vst.msk [vmem:[%s236] sm:$0xff] %vm291, %v290
        %v293 = vld [vmem:[%s236] sm:$0xff]
        %294 = vadd.xlane.f32.xlu0 %v278
        %v295 = vpop.xlane.xlu0 %294
        %v296 = vadd.f32 %v293, %v295
        %vm297 = vcmask 23568
        %298 = vst.msk [vmem:[%s236] sm:$0xff] %vm297, %v296
        %p299 = scmp.lt.s32.totalorder %s23, 1
        %s300 = scalar_select %p299, %s23, 1
        %s301 = smul.addr %s300, 8
        %s302 = scalar_lea.vmem %s2, %s301
        // Predicated region
        $region41: #{tpu_custom_call.1} parent=27 // pred_check
          %p303 = pneg %p117
        $region42: #{tpu_custom_call.1} parent=27 // pred_check_branch
          %305 = sbr.rel (%p303) target = $region44
        $region43: #{tpu_custom_call.1} parent=27 // pred_region
          _
        $region44: #{tpu_custom_call.1} parent=27 // pred_fallthru
          _
      $region28: #{tpu_custom_call.1} parent=5 // pred_fallthru
        _
      %p306 = scmp.le.s32.totalorder 2, %s14
      // Predicated region
      $region45: #{tpu_custom_call.1} parent=5 // pred_check
        %p307 = pneg %p306
      $region46: #{tpu_custom_call.1} parent=5 // pred_check_branch
        %309 = sbr.rel (%p307) target = $region48
      $region47: #{tpu_custom_call.1} parent=5 // pred_region
        %s310 = ssub.s32 %s14, 2
        // Predicated region
        $region49: #{tpu_custom_call.1} parent=47 // pred_check
          %p311 = pneg %p123
        $region50: #{tpu_custom_call.1} parent=47 // pred_check_branch
          %313 = sbr.rel (%p311) target = $region52
        $region51: #{tpu_custom_call.1} parent=47 // pred_region
          %p314 = scmp.lt.s32.totalorder %s25, 1
          %s315 = scalar_select %p314, %s25, 1
          %s316 = smul.addr %s315, 8
          %s317 = scalar_lea.vmem %s2, %s316
        $region52: #{tpu_custom_call.1} parent=47 // pred_fallthru
          _
      $region48: #{tpu_custom_call.1} parent=5 // pred_fallthru
        _
    $region6: #{tpu_custom_call.1} parent=1 // loop_footer
      %s18 = sadd.s32 1, %s14
    $region7: #{tpu_custom_call.1} parent=1 // loop_footer_branch
      %13 = sbr.rel target = $region3
    $region8: #{tpu_custom_call.1} parent=1 // loop_exit
      _
    %318 = vsyncpa [#allocation3], 1
    %s319 = scalar_lea.sflag [#allocation3], 1
    %320 = vsyncpa %s319, 1
    %321 = vsyncpa [#allocation5], 1
    %s322 = scalar_lea.sflag [#allocation5], 1
    %323 = vsyncpa %s322, 1

</llo_original>
